<compile_context>
chip_gen: v7x
topology: tpu7x:2x2x1
jax: 0.10.0
libtpu: 0.0.40
codegen_flags: <defaults>
</compile_context>

<pallas_src>
import functools

import jax
import jax.numpy as jnp
from jax.experimental import pallas as pl
from jax.experimental.pallas import tpu as pltpu


def _cdiv(a, b):
    return (a + b - 1) // b


def _round_up(x, m):
    return _cdiv(x, m) * m


def _autoencoder_kernel(obs_ref,
                        ew1_ref, eb1_ref, ew2_ref, eb2_ref,
                        dw1_ref, db1_ref, dw2_ref, db2_ref,
                        pred_ref, latent_ref):
    """Fused encoder + decoder forward on one batch tile.

    obs_ref:    (TB, obs_dim)      activation tile (compute dtype)
    ew1/eb1:    (obs_dim, hid), (1, hid)
    ew2/eb2:    (hid, lat),     (1, lat)
    dw1/db1:    (lat, hid),     (1, hid)
    dw2/db2:    (hid, obs_dim), (1, obs_dim)
    pred_ref:   (TB, obs_dim)   reconstructed observation
    latent_ref: (TB, lat)       encoder output
    """
    x = obs_ref[...]
    cdt = ew1_ref.dtype  # compute dtype for MXU inputs (f32 or bf16)

    # ---- Encoder ----  (f32 MXU accumulation + f32 bias/ReLU epilogue)
    h = jnp.dot(x, ew1_ref[...], preferred_element_type=jnp.float32) + eb1_ref[...]
    h = jnp.maximum(h, 0.0)
    z = jnp.dot(h.astype(cdt), ew2_ref[...],
                preferred_element_type=jnp.float32) + eb2_ref[...]

    # ---- Decoder ----
    dh = jnp.dot(z.astype(cdt), dw1_ref[...],
                 preferred_element_type=jnp.float32) + db1_ref[...]
    dh = jnp.maximum(dh, 0.0)
    pred = jnp.dot(dh.astype(cdt), dw2_ref[...],
                   preferred_element_type=jnp.float32) + db2_ref[...]

    latent_ref[...] = z.astype(latent_ref.dtype)
    pred_ref[...] = pred.astype(pred_ref.dtype)


@functools.partial(
    jax.jit,
    static_argnames=("block_batch", "compute_dtype", "out_dtype",
                     "single_buffer_weights"))
def _forward_impl(obs, params, *, block_batch, compute_dtype, out_dtype,
                  single_buffer_weights):
    ew1, eb1, ew2, eb2, dw1, db1, dw2, db2 = params
    batch, obs_dim = obs.shape
    hidden_dim = ew1.shape[1]
    latent_dim = ew2.shape[1]

    # ---- batch tiling -------------------------------------------------------
    # >=2 tiles once batch >= 16 so v7x's two TensorCores both get work; tiles
    # are sublane aligned (x8); batch_p derived from the tile count so the
    # ragged tail wastes < tb rows (not a whole extra block_batch).
    n_tiles = max(_cdiv(batch, block_batch), 2 if batch >= 16 else 1)
    tb = _round_up(_cdiv(batch, n_tiles), 8)
    n_tiles = _cdiv(batch, tb)
    batch_p = n_tiles * tb

    # ---- operands: NO feature padding.  Blocks equal to the full feature dim
    # are legal; Mosaic pads to the (8,128) tile in VMEM, so HBM traffic for the
    # batch-streamed arrays stays at the true obs/latent widths. -------------
    obs_c = obs.astype(compute_dtype)
    if batch_p != batch:  # only the ragged batch tail is zero-padded (exact)
        obs_c = jnp.pad(obs_c, ((0, batch_p - batch), (0, 0)))

    ew1c, ew2c = ew1.astype(compute_dtype), ew2.astype(compute_dtype)
    dw1c, dw2c = dw1.astype(compute_dtype), dw2.astype(compute_dtype)
    eb1f, eb2f = eb1.astype(jnp.float32), eb2.astype(jnp.float32)
    db1f, db2f = db1.astype(jnp.float32), db2.astype(jnp.float32)

    def resident(a):
        # Same block every grid step -> pinned in VMEM.  Single-buffering skips
        # the useless second pipeline copy (halves resident-weight footprint;
        # matters for large hidden dims on v7x's 64 MiB VMEM).
        if single_buffer_weights:
            return pl.BlockSpec(a.shape, lambda i: (0, 0),
                                pipeline_mode=pl.Buffered(1))
        return pl.BlockSpec(a.shape, lambda i: (0, 0))

    in_specs = [
        pl.BlockSpec((tb, obs_dim), lambda i: (i, 0)),   # obs tile (pipelined)
        resident(ew1c), resident(eb1f),
        resident(ew2c), resident(eb2f),
        resident(dw1c), resident(db1f),
        resident(dw2c), resident(db2f),
    ]
    out_specs = (
        pl.BlockSpec((tb, obs_dim), lambda i: (i, 0)),     # pred tile
        pl.BlockSpec((tb, latent_dim), lambda i: (i, 0)),  # latent tile
    )

    # ---- explicit VMEM budget + advisory cost estimate ----------------------
    wsize = jnp.dtype(compute_dtype).itemsize
    osize = jnp.dtype(out_dtype).itemsize
    w_elems = (obs_dim * hidden_dim + hidden_dim * latent_dim
               + latent_dim * hidden_dim + hidden_dim * obs_dim)
    b_elems = 2 * hidden_dim + latent_dim + obs_dim
    weight_bytes = w_elems * wsize + b_elems * 4
    stream_bytes = 2 * tb * (obs_dim * wsize + (obs_dim + latent_dim) * osize)
    interm_bytes = 4 * tb * (2 * hidden_dim + latent_dim + obs_dim) * 4
    vmem_limit = int(min(64 * 2**20,                     # v7x physical cap
                         max(8 * 2**20,
                             2 * (weight_bytes + stream_bytes + interm_bytes)
                             + (2 << 20))))
    # TODO(synk): for hidden dims where f32 weights alone exceed ~half of v7x's
    # 64 MiB VMEM, switch to bf16 weights or add a K-tiling grid axis.

    cost = pl.CostEstimate(
        flops=int(2 * batch_p * w_elems),
        transcendentals=0,
        bytes_accessed=int(batch_p * (obs_dim * wsize
                                      + (obs_dim + latent_dim) * osize)
                           + weight_bytes),
    )

    pred_pad, latent_pad = pl.pallas_call(
        _autoencoder_kernel,
        grid=(n_tiles,),
        in_specs=in_specs,
        out_specs=out_specs,
        out_shape=(
            jax.ShapeDtypeStruct((batch_p, obs_dim), out_dtype),
            jax.ShapeDtypeStruct((batch_p, latent_dim), out_dtype),
        ),
        compiler_params=pltpu.CompilerParams(
            dimension_semantics=("parallel",),   # v7x: batch tiles over 2 TCs
            vmem_limit_bytes=vmem_limit,
        ),
        cost_estimate=cost,
    )(obs_c, ew1c, eb1f, ew2c, eb2f, dw1c, db1f, dw2c, db2f)

    if batch_p != batch:
        pred_pad = pred_pad[:batch]
        latent_pad = latent_pad[:batch]
    return pred_pad, latent_pad


def autoencoder_forward(obs, params, memory=None, *, block_batch=512,
                        compute_dtype=jnp.float32, out_dtype=None):
    """Pallas-backed equivalent of AutoEncoder.forward(obs, memory)."""
    out_dtype = compute_dtype if out_dtype is None else out_dtype
    kwargs = dict(block_batch=block_batch, compute_dtype=compute_dtype,
                  out_dtype=out_dtype)
    try:
        pred, latent = _forward_impl(obs, params, single_buffer_weights=True,
                                     **kwargs)
    except Exception:
        # Fallback for jax builds where pipeline_mode=pl.Buffered(1) is not
        # supported on pallas_call inputs; only costs a duplicate weight buffer.
        pred, latent = _forward_impl(obs, params, single_buffer_weights=False,
                                     **kwargs)
    # `memory` is passed through unchanged by the reference mlp Encoder (no RNN).
    return pred, latent, memory


def init_params(key, obs_dim, hidden_dim, latent_dim):
    """Deterministic synthetic parameter init (matches Linear layer shapes)."""
    ks = jax.random.split(key, 8)

    def lin(k, fan_in, fan_out):
        scale = 1.0 / jnp.sqrt(jnp.float32(fan_in))
        return jax.random.uniform(k, (fan_in, fan_out), jnp.float32, -scale, scale)

    ew1 = lin(ks[0], obs_dim, hidden_dim)
    eb1 = jax.random.uniform(ks[1], (1, hidden_dim), jnp.float32, -0.05, 0.05)
    ew2 = lin(ks[2], hidden_dim, latent_dim)
    eb2 = jax.random.uniform(ks[3], (1, latent_dim), jnp.float32, -0.05, 0.05)
    dw1 = lin(ks[4], latent_dim, hidden_dim)
    db1 = jax.random.uniform(ks[5], (1, hidden_dim), jnp.float32, -0.05, 0.05)
    dw2 = lin(ks[6], hidden_dim, obs_dim)
    db2 = jax.random.uniform(ks[7], (1, obs_dim), jnp.float32, -0.05, 0.05)
    return (ew1, eb1, ew2, eb2, dw1, db1, dw2, db2)


def _reference_forward(obs, params):
    """Pure-JAX reference for correctness check."""
    ew1, eb1, ew2, eb2, dw1, db1, dw2, db2 = params
    h = jnp.maximum(obs @ ew1 + eb1, 0.0)
    z = h @ ew2 + eb2
    dh = jnp.maximum(z @ dw1 + db1, 0.0)
    pred = dh @ dw2 + db2
    return pred, z


if __name__ == "__main__":
    key = jax.random.PRNGKey(0)
    k_obs, k_par, k_big = jax.random.split(key, 3)

    batch, obs_dim, hidden_dim, latent_dim = 8, 32, 64, 16

    obs = jax.random.normal(k_obs, (batch, obs_dim), jnp.float32)
    params = init_params(k_par, obs_dim, hidden_dim, latent_dim)

    # --- tiny batch, f32 path: single grid step, no padding anywhere --------
    pred, latent, memory = autoencoder_forward(obs, params, memory=None)
    jax.block_until_ready((pred, latent))

    ref_pred, ref_latent = _reference_forward(obs, params)
    assert pred.shape == (batch, obs_dim)
    assert latent.shape == (batch, latent_dim)
    assert memory is None
    assert jnp.allclose(pred, ref_pred, atol=1e-5, rtol=1e-5)
    assert jnp.allclose(latent, ref_latent, atol=1e-5, rtol=1e-5)

    # --- larger non-tile-multiple batch: pipelined grid + ragged-tail pad ---
    big_batch = 200
    obs_big = jax.random.normal(k_big, (big_batch, obs_dim), jnp.float32)
    pred_b, latent_b, _ = autoencoder_forward(obs_big, params, memory=None,
                                              block_batch=64)
    jax.block_until_ready((pred_b, latent_b))
    ref_pred_b, ref_latent_b = _reference_forward(obs_big, params)
    assert pred_b.shape == (big_batch, obs_dim)
    assert latent_b.shape == (big_batch, latent_dim)
    assert jnp.allclose(pred_b, ref_pred_b, atol=1e-5, rtol=1e-5)
    assert jnp.allclose(latent_b, ref_latent_b, atol=1e-5, rtol=1e-5)

    # --- bf16 fast path (v6e/v7x MXU-native): relaxed tolerance -------------
    pred_h, latent_h, _ = autoencoder_forward(obs_big, params, memory=None,
                                              block_batch=64,
                                              compute_dtype=jnp.bfloat16)
    jax.block_until_ready((pred_h, latent_h))
    assert pred_h.dtype == jnp.bfloat16 and latent_h.dtype == jnp.bfloat16
    assert float(jnp.max(jnp.abs(pred_h.astype(jnp.float32) - ref_pred_b))) < 0.15
    assert float(jnp.max(jnp.abs(latent_h.astype(jnp.float32) - ref_latent_b))) < 0.15

    print("KERNEL_OK")
</pallas_src>

<mosaic_0001>
module attributes {stable_mosaic.version = 11 : i64} {
  func.func @_autoencoder_kernel(%arg0: i32, %arg1: memref<8x32xf32, #tpu.memory_space<vmem>>, %arg2: memref<32x64xf32, #tpu.memory_space<vmem>>, %arg3: memref<1x64xf32, #tpu.memory_space<vmem>>, %arg4: memref<64x16xf32, #tpu.memory_space<vmem>>, %arg5: memref<1x16xf32, #tpu.memory_space<vmem>>, %arg6: memref<16x64xf32, #tpu.memory_space<vmem>>, %arg7: memref<1x64xf32, #tpu.memory_space<vmem>>, %arg8: memref<64x32xf32, #tpu.memory_space<vmem>>, %arg9: memref<1x32xf32, #tpu.memory_space<vmem>>, %arg10: memref<8x32xf32, #tpu.memory_space<vmem>>, %arg11: memref<8x16xf32, #tpu.memory_space<vmem>>) attributes {dimension_semantics = [#tpu.dimension_semantics<parallel>], iteration_bounds = array<i64: 1>, scalar_prefetch = 0 : i64, scratch_operands = 0 : i64, tpu.core_type = #tpu.core_type<tc>, window_params = [{transform_indices = @transform_0, window_bounds = array<i64: 8, 32>}, {pipeline_mode = #tpu.pipeline_mode<synchronous>, transform_indices = @transform_1, window_bounds = array<i64: 32, 64>}, {pipeline_mode = #tpu.pipeline_mode<synchronous>, transform_indices = @transform_2, window_bounds = array<i64: 1, 64>}, {pipeline_mode = #tpu.pipeline_mode<synchronous>, transform_indices = @transform_3, window_bounds = array<i64: 64, 16>}, {pipeline_mode = #tpu.pipeline_mode<synchronous>, transform_indices = @transform_4, window_bounds = array<i64: 1, 16>}, {pipeline_mode = #tpu.pipeline_mode<synchronous>, transform_indices = @transform_5, window_bounds = array<i64: 16, 64>}, {pipeline_mode = #tpu.pipeline_mode<synchronous>, transform_indices = @transform_6, window_bounds = array<i64: 1, 64>}, {pipeline_mode = #tpu.pipeline_mode<synchronous>, transform_indices = @transform_7, window_bounds = array<i64: 64, 32>}, {pipeline_mode = #tpu.pipeline_mode<synchronous>, transform_indices = @transform_8, window_bounds = array<i64: 1, 32>}, {transform_indices = @transform_9, window_bounds = array<i64: 8, 32>}, {transform_indices = @transform_10, window_bounds = array<i64: 8, 16>}]} {
    %c0 = arith.constant 0 : index
    %c0_0 = arith.constant 0 : index
    %0 = vector.load %arg1[%c0, %c0_0] : memref<8x32xf32, #tpu.memory_space<vmem>>, vector<8x32xf32>
    %c0_1 = arith.constant 0 : index
    %c0_2 = arith.constant 0 : index
    %1 = vector.load %arg2[%c0_1, %c0_2] : memref<32x64xf32, #tpu.memory_space<vmem>>, vector<32x64xf32>
    %cst = arith.constant dense<0.000000e+00> : vector<8x64xf32>
    %2 = tpu.matmul %0, %1, %cst {dimension_numbers = #tpu.dot_dimension_numbers<[1], [0], [0], [1], [0, 0, 1, 1], [], []>} : vector<8x32xf32>, vector<32x64xf32>, vector<8x64xf32> -> vector<8x64xf32>
    %c0_3 = arith.constant 0 : index
    %c0_4 = arith.constant 0 : index
    %3 = vector.load %arg3[%c0_3, %c0_4] : memref<1x64xf32, #tpu.memory_space<vmem>>, vector<1x64xf32>
    %4 = vector.broadcast %3 : vector<1x64xf32> to vector<8x64xf32>
    %5 = arith.addf %2, %4 : vector<8x64xf32>
    %cst_5 = arith.constant 0.000000e+00 : f32
    %6 = vector.broadcast %cst_5 : f32 to vector<8x64xf32>
    %7 = arith.maximumf %5, %6 : vector<8x64xf32>
    %c0_6 = arith.constant 0 : index
    %c0_7 = arith.constant 0 : index
    %8 = vector.load %arg4[%c0_6, %c0_7] : memref<64x16xf32, #tpu.memory_space<vmem>>, vector<64x16xf32>
    %cst_8 = arith.constant dense<0.000000e+00> : vector<8x16xf32>
    %9 = tpu.matmul %7, %8, %cst_8 {dimension_numbers = #tpu.dot_dimension_numbers<[1], [0], [0], [1], [0, 0, 1, 1], [], []>} : vector<8x64xf32>, vector<64x16xf32>, vector<8x16xf32> -> vector<8x16xf32>
    %c0_9 = arith.constant 0 : index
    %c0_10 = arith.constant 0 : index
    %10 = vector.load %arg5[%c0_9, %c0_10] : memref<1x16xf32, #tpu.memory_space<vmem>>, vector<1x16xf32>
    %11 = vector.broadcast %10 : vector<1x16xf32> to vector<8x16xf32>
    %12 = arith.addf %9, %11 : vector<8x16xf32>
    %c0_11 = arith.constant 0 : index
    %c0_12 = arith.constant 0 : index
    %13 = vector.load %arg6[%c0_11, %c0_12] : memref<16x64xf32, #tpu.memory_space<vmem>>, vector<16x64xf32>
    %cst_13 = arith.constant dense<0.000000e+00> : vector<8x64xf32>
    %14 = tpu.matmul %12, %13, %cst_13 {dimension_numbers = #tpu.dot_dimension_numbers<[1], [0], [0], [1], [0, 0, 1, 1], [], []>} : vector<8x16xf32>, vector<16x64xf32>, vector<8x64xf32> -> vector<8x64xf32>
    %c0_14 = arith.constant 0 : index
    %c0_15 = arith.constant 0 : index
    %15 = vector.load %arg7[%c0_14, %c0_15] : memref<1x64xf32, #tpu.memory_space<vmem>>, vector<1x64xf32>
    %16 = vector.broadcast %15 : vector<1x64xf32> to vector<8x64xf32>
    %17 = arith.addf %14, %16 : vector<8x64xf32>
    %cst_16 = arith.constant 0.000000e+00 : f32
    %18 = vector.broadcast %cst_16 : f32 to vector<8x64xf32>
    %19 = arith.maximumf %17, %18 : vector<8x64xf32>
    %c0_17 = arith.constant 0 : index
    %c0_18 = arith.constant 0 : index
    %20 = vector.load %arg8[%c0_17, %c0_18] : memref<64x32xf32, #tpu.memory_space<vmem>>, vector<64x32xf32>
    %cst_19 = arith.constant dense<0.000000e+00> : vector<8x32xf32>
    %21 = tpu.matmul %19, %20, %cst_19 {dimension_numbers = #tpu.dot_dimension_numbers<[1], [0], [0], [1], [0, 0, 1, 1], [], []>} : vector<8x64xf32>, vector<64x32xf32>, vector<8x32xf32> -> vector<8x32xf32>
    %c0_20 = arith.constant 0 : index
    %c0_21 = arith.constant 0 : index
    %22 = vector.load %arg9[%c0_20, %c0_21] : memref<1x32xf32, #tpu.memory_space<vmem>>, vector<1x32xf32>
    %23 = vector.broadcast %22 : vector<1x32xf32> to vector<8x32xf32>
    %24 = arith.addf %21, %23 : vector<8x32xf32>
    %c0_22 = arith.constant 0 : index
    %c0_23 = arith.constant 0 : index
    %25 = vector.load %arg11[%c0_22, %c0_23] : memref<8x16xf32, #tpu.memory_space<vmem>>, vector<8x16xf32>
    tpu.vector_store %arg11[%c0_22, %c0_23], %12 {strides = array<i32>} : memref<8x16xf32, #tpu.memory_space<vmem>>, vector<8x16xf32>,
    %c0_24 = arith.constant 0 : index
    %c0_25 = arith.constant 0 : index
    %26 = vector.load %arg10[%c0_24, %c0_25] : memref<8x32xf32, #tpu.memory_space<vmem>>, vector<8x32xf32>
    tpu.vector_store %arg10[%c0_24, %c0_25], %24 {strides = array<i32>} : memref<8x32xf32, #tpu.memory_space<vmem>>, vector<8x32xf32>,
    return
  }
  func.func @transform_0(%arg0: i32) -> (i32, i32) {
    %c0_i32 = arith.constant 0 : i32
    %c0_i32_0 = arith.constant 0 : i32
    return %arg0, %c0_i32 : i32, i32
  }
  func.func @transform_1(%arg0: i32) -> (i32, i32) {
    %c0_i32 = arith.constant 0 : i32
    %c0_i32_0 = arith.constant 0 : i32
    %c0_i32_1 = arith.constant 0 : i32
    return %c0_i32, %c0_i32_0 : i32, i32
  }
  func.func @transform_2(%arg0: i32) -> (i32, i32) {
    %c0_i32 = arith.constant 0 : i32
    %c0_i32_0 = arith.constant 0 : i32
    %c0_i32_1 = arith.constant 0 : i32
    return %c0_i32, %c0_i32_0 : i32, i32
  }
  func.func @transform_3(%arg0: i32) -> (i32, i32) {
    %c0_i32 = arith.constant 0 : i32
    %c0_i32_0 = arith.constant 0 : i32
    %c0_i32_1 = arith.constant 0 : i32
    return %c0_i32, %c0_i32_0 : i32, i32
  }
  func.func @transform_4(%arg0: i32) -> (i32, i32) {
    %c0_i32 = arith.constant 0 : i32
    %c0_i32_0 = arith.constant 0 : i32
    %c0_i32_1 = arith.constant 0 : i32
    return %c0_i32, %c0_i32_0 : i32, i32
  }
  func.func @transform_5(%arg0: i32) -> (i32, i32) {
    %c0_i32 = arith.constant 0 : i32
    %c0_i32_0 = arith.constant 0 : i32
    %c0_i32_1 = arith.constant 0 : i32
    return %c0_i32, %c0_i32_0 : i32, i32
  }
  func.func @transform_6(%arg0: i32) -> (i32, i32) {
    %c0_i32 = arith.constant 0 : i32
    %c0_i32_0 = arith.constant 0 : i32
    %c0_i32_1 = arith.constant 0 : i32
    return %c0_i32, %c0_i32_0 : i32, i32
  }
  func.func @transform_7(%arg0: i32) -> (i32, i32) {
    %c0_i32 = arith.constant 0 : i32
    %c0_i32_0 = arith.constant 0 : i32
    %c0_i32_1 = arith.constant 0 : i32
    return %c0_i32, %c0_i32_0 : i32, i32
  }
  func.func @transform_8(%arg0: i32) -> (i32, i32) {
    %c0_i32 = arith.constant 0 : i32
    %c0_i32_0 = arith.constant 0 : i32
    %c0_i32_1 = arith.constant 0 : i32
    return %c0_i32, %c0_i32_0 : i32, i32
  }
  func.func @transform_9(%arg0: i32) -> (i32, i32) {
    %c0_i32 = arith.constant 0 : i32
    %c0_i32_0 = arith.constant 0 : i32
    return %arg0, %c0_i32 : i32, i32
  }
  func.func @transform_10(%arg0: i32) -> (i32, i32) {
    %c0_i32 = arith.constant 0 : i32
    %c0_i32_0 = arith.constant 0 : i32
    return %arg0, %c0_i32 : i32, i32
  }
}

module attributes {stable_mosaic.version = 11 : i64} {
  func.func @_autoencoder_kernel(%arg0: i32, %arg1: memref<8x32xf32, #tpu.memory_space<vmem>>, %arg2: memref<32x64xf32, #tpu.memory_space<vmem>>, %arg3: memref<1x64xf32, #tpu.memory_space<vmem>>, %arg4: memref<64x16xf32, #tpu.memory_space<vmem>>, %arg5: memref<1x16xf32, #tpu.memory_space<vmem>>, %arg6: memref<16x64xf32, #tpu.memory_space<vmem>>, %arg7: memref<1x64xf32, #tpu.memory_space<vmem>>, %arg8: memref<64x32xf32, #tpu.memory_space<vmem>>, %arg9: memref<1x32xf32, #tpu.memory_space<vmem>>, %arg10: memref<8x32xf32, #tpu.memory_space<vmem>>, %arg11: memref<8x16xf32, #tpu.memory_space<vmem>>) attributes {dimension_semantics = [#tpu.dimension_semantics<parallel>], iteration_bounds = array<i64: 1>, scalar_prefetch = 0 : i64, scratch_operands = 0 : i64, tpu.core_type = #tpu.core_type<tc>, window_params = [{transform_indices = @transform_0, window_bounds = array<i64: 8, 32>}, {pipeline_mode = #tpu.pipeline_mode<synchronous>, transform_indices = @transform_1, window_bounds = array<i64: 32, 64>}, {pipeline_mode = #tpu.pipeline_mode<synchronous>, transform_indices = @transform_2, window_bounds = array<i64: 1, 64>}, {pipeline_mode = #tpu.pipeline_mode<synchronous>, transform_indices = @transform_3, window_bounds = array<i64: 64, 16>}, {pipeline_mode = #tpu.pipeline_mode<synchronous>, transform_indices = @transform_4, window_bounds = array<i64: 1, 16>}, {pipeline_mode = #tpu.pipeline_mode<synchronous>, transform_indices = @transform_5, window_bounds = array<i64: 16, 64>}, {pipeline_mode = #tpu.pipeline_mode<synchronous>, transform_indices = @transform_6, window_bounds = array<i64: 1, 64>}, {pipeline_mode = #tpu.pipeline_mode<synchronous>, transform_indices = @transform_7, window_bounds = array<i64: 64, 32>}, {pipeline_mode = #tpu.pipeline_mode<synchronous>, transform_indices = @transform_8, window_bounds = array<i64: 1, 32>}, {transform_indices = @transform_9, window_bounds = array<i64: 8, 32>}, {transform_indices = @transform_10, window_bounds = array<i64: 8, 16>}]} {
    %c0 = arith.constant 0 : index
    %c0_0 = arith.constant 0 : index
    %0 = vector.load %arg1[%c0, %c0_0] : memref<8x32xf32, #tpu.memory_space<vmem>>, vector<8x32xf32>
    %c0_1 = arith.constant 0 : index
    %c0_2 = arith.constant 0 : index
    %1 = vector.load %arg2[%c0_1, %c0_2] : memref<32x64xf32, #tpu.memory_space<vmem>>, vector<32x64xf32>
    %cst = arith.constant dense<0.000000e+00> : vector<8x64xf32>
    %2 = tpu.matmul %0, %1, %cst {dimension_numbers = #tpu.dot_dimension_numbers<[1], [0], [0], [1], [0, 0, 1, 1], [], []>} : vector<8x32xf32>, vector<32x64xf32>, vector<8x64xf32> -> vector<8x64xf32>
    %c0_3 = arith.constant 0 : index
    %c0_4 = arith.constant 0 : index
    %3 = vector.load %arg3[%c0_3, %c0_4] : memref<1x64xf32, #tpu.memory_space<vmem>>, vector<1x64xf32>
    %4 = vector.broadcast %3 : vector<1x64xf32> to vector<8x64xf32>
    %5 = arith.addf %2, %4 : vector<8x64xf32>
    %cst_5 = arith.constant 0.000000e+00 : f32
    %6 = vector.broadcast %cst_5 : f32 to vector<8x64xf32>
    %7 = arith.maximumf %5, %6 : vector<8x64xf32>
    %c0_6 = arith.constant 0 : index
    %c0_7 = arith.constant 0 : index
    %8 = vector.load %arg4[%c0_6, %c0_7] : memref<64x16xf32, #tpu.memory_space<vmem>>, vector<64x16xf32>
    %cst_8 = arith.constant dense<0.000000e+00> : vector<8x16xf32>
    %9 = tpu.matmul %7, %8, %cst_8 {dimension_numbers = #tpu.dot_dimension_numbers<[1], [0], [0], [1], [0, 0, 1, 1], [], []>} : vector<8x64xf32>, vector<64x16xf32>, vector<8x16xf32> -> vector<8x16xf32>
    %c0_9 = arith.constant 0 : index
    %c0_10 = arith.constant 0 : index
    %10 = vector.load %arg5[%c0_9, %c0_10] : memref<1x16xf32, #tpu.memory_space<vmem>>, vector<1x16xf32>
    %11 = vector.broadcast %10 : vector<1x16xf32> to vector<8x16xf32>
    %12 = arith.addf %9, %11 : vector<8x16xf32>
    %c0_11 = arith.constant 0 : index
    %c0_12 = arith.constant 0 : index
    %13 = vector.load %arg6[%c0_11, %c0_12] : memref<16x64xf32, #tpu.memory_space<vmem>>, vector<16x64xf32>
    %cst_13 = arith.constant dense<0.000000e+00> : vector<8x64xf32>
    %14 = tpu.matmul %12, %13, %cst_13 {dimension_numbers = #tpu.dot_dimension_numbers<[1], [0], [0], [1], [0, 0, 1, 1], [], []>} : vector<8x16xf32>, vector<16x64xf32>, vector<8x64xf32> -> vector<8x64xf32>
    %c0_14 = arith.constant 0 : index
    %c0_15 = arith.constant 0 : index
    %15 = vector.load %arg7[%c0_14, %c0_15] : memref<1x64xf32, #tpu.memory_space<vmem>>, vector<1x64xf32>
    %16 = vector.broadcast %15 : vector<1x64xf32> to vector<8x64xf32>
    %17 = arith.addf %14, %16 : vector<8x64xf32>
    %cst_16 = arith.constant 0.000000e+00 : f32
    %18 = vector.broadcast %cst_16 : f32 to vector<8x64xf32>
    %19 = arith.maximumf %17, %18 : vector<8x64xf32>
    %c0_17 = arith.constant 0 : index
    %c0_18 = arith.constant 0 : index
    %20 = vector.load %arg8[%c0_17, %c0_18] : memref<64x32xf32, #tpu.memory_space<vmem>>, vector<64x32xf32>
    %cst_19 = arith.constant dense<0.000000e+00> : vector<8x32xf32>
    %21 = tpu.matmul %19, %20, %cst_19 {dimension_numbers = #tpu.dot_dimension_numbers<[1], [0], [0], [1], [0, 0, 1, 1], [], []>} : vector<8x64xf32>, vector<64x32xf32>, vector<8x32xf32> -> vector<8x32xf32>
    %c0_20 = arith.constant 0 : index
    %c0_21 = arith.constant 0 : index
    %22 = vector.load %arg9[%c0_20, %c0_21] : memref<1x32xf32, #tpu.memory_space<vmem>>, vector<1x32xf32>
    %23 = vector.broadcast %22 : vector<1x32xf32> to vector<8x32xf32>
    %24 = arith.addf %21, %23 : vector<8x32xf32>
    %c0_22 = arith.constant 0 : index
    %c0_23 = arith.constant 0 : index
    %25 = vector.load %arg11[%c0_22, %c0_23] : memref<8x16xf32, #tpu.memory_space<vmem>>, vector<8x16xf32>
    tpu.vector_store %arg11[%c0_22, %c0_23], %12 {strides = array<i32>} : memref<8x16xf32, #tpu.memory_space<vmem>>, vector<8x16xf32>,
    %c0_24 = arith.constant 0 : index
    %c0_25 = arith.constant 0 : index
    %26 = vector.load %arg10[%c0_24, %c0_25] : memref<8x32xf32, #tpu.memory_space<vmem>>, vector<8x32xf32>
    tpu.vector_store %arg10[%c0_24, %c0_25], %24 {strides = array<i32>} : memref<8x32xf32, #tpu.memory_space<vmem>>, vector<8x32xf32>,
    return
  }
  func.func @transform_0(%arg0: i32) -> (i32, i32) {
    %c0_i32 = arith.constant 0 : i32
    %c0_i32_0 = arith.constant 0 : i32
    return %arg0, %c0_i32 : i32, i32
  }
  func.func @transform_1(%arg0: i32) -> (i32, i32) {
    %c0_i32 = arith.constant 0 : i32
    %c0_i32_0 = arith.constant 0 : i32
    %c0_i32_1 = arith.constant 0 : i32
    return %c0_i32, %c0_i32_0 : i32, i32
  }
  func.func @transform_2(%arg0: i32) -> (i32, i32) {
    %c0_i32 = arith.constant 0 : i32
    %c0_i32_0 = arith.constant 0 : i32
    %c0_i32_1 = arith.constant 0 : i32
    return %c0_i32, %c0_i32_0 : i32, i32
  }
  func.func @transform_3(%arg0: i32) -> (i32, i32) {
    %c0_i32 = arith.constant 0 : i32
    %c0_i32_0 = arith.constant 0 : i32
    %c0_i32_1 = arith.constant 0 : i32
    return %c0_i32, %c0_i32_0 : i32, i32
  }
  func.func @transform_4(%arg0: i32) -> (i32, i32) {
    %c0_i32 = arith.constant 0 : i32
    %c0_i32_0 = arith.constant 0 : i32
    %c0_i32_1 = arith.constant 0 : i32
    return %c0_i32, %c0_i32_0 : i32, i32
  }
  func.func @transform_5(%arg0: i32) -> (i32, i32) {
    %c0_i32 = arith.constant 0 : i32
    %c0_i32_0 = arith.constant 0 : i32
    %c0_i32_1 = arith.constant 0 : i32
    return %c0_i32, %c0_i32_0 : i32, i32
  }
  func.func @transform_6(%arg0: i32) -> (i32, i32) {
    %c0_i32 = arith.constant 0 : i32
    %c0_i32_0 = arith.constant 0 : i32
    %c0_i32_1 = arith.constant 0 : i32
    return %c0_i32, %c0_i32_0 : i32, i32
  }
  func.func @transform_7(%arg0: i32) -> (i32, i32) {
    %c0_i32 = arith.constant 0 : i32
    %c0_i32_0 = arith.constant 0 : i32
    %c0_i32_1 = arith.constant 0 : i32
    return %c0_i32, %c0_i32_0 : i32, i32
  }
  func.func @transform_8(%arg0: i32) -> (i32, i32) {
    %c0_i32 = arith.constant 0 : i32
    %c0_i32_0 = arith.constant 0 : i32
    %c0_i32_1 = arith.constant 0 : i32
    return %c0_i32, %c0_i32_0 : i32, i32
  }
  func.func @transform_9(%arg0: i32) -> (i32, i32) {
    %c0_i32 = arith.constant 0 : i32
    %c0_i32_0 = arith.constant 0 : i32
    return %arg0, %c0_i32 : i32, i32
  }
  func.func @transform_10(%arg0: i32) -> (i32, i32) {
    %c0_i32 = arith.constant 0 : i32
    %c0_i32_0 = arith.constant 0 : i32
    return %arg0, %c0_i32 : i32, i32
  }
}

</mosaic_0001>

<llo_original>
// kernel: _forward_impl.1
$region0: #{_forward_impl.1}
  #allocation0 [shape = 'u32[]', space=smem, size = 0x4, offset = 0x4, fixed_abs, tag = 'smem constant byte address 0x4 - core index']
  #allocation1 [shape = 'u32[144,128]{1,0:T(1,128)}', space=vmem, size = 0x12000, scoped, tag = 'internal scratch']
  %s0 = inlined_call_operand.vmem [shape: f32[8,32], index: 0, kind: input, shape index: {}]
  %s1 = inlined_call_operand.vmem [shape: f32[32,64], index: 1, kind: input, shape index: {}]
  %s2 = inlined_call_operand.vmem [shape: f32[1,64], index: 2, kind: input, shape index: {}]
  %s3 = inlined_call_operand.vmem [shape: f32[64,16], index: 3, kind: input, shape index: {}]
  %s4 = inlined_call_operand.vmem [shape: f32[1,16], index: 4, kind: input, shape index: {}]
  %s5 = inlined_call_operand.vmem [shape: f32[16,64], index: 5, kind: input, shape index: {}]
  %s6 = inlined_call_operand.vmem [shape: f32[1,64], index: 6, kind: input, shape index: {}]
  %s7 = inlined_call_operand.vmem [shape: f32[64,32], index: 7, kind: input, shape index: {}]
  %s8 = inlined_call_operand.vmem [shape: f32[1,32], index: 8, kind: input, shape index: {}]
  %s9 = inlined_call_operand.hbm [shape: f32[8,32], index: 9, kind: output, shape index: {0}]
  %s10 = inlined_call_operand.hbm [shape: f32[8,16], index: 10, kind: output, shape index: {1}]
  %11 = xla_tuple %s9, %s10
  %s12 = sld [smem:[#allocation0]]
  $region54: #{_forward_impl.1} parent=0
    _
  %s14 = ssub.s32 1, %s12
  %s15 = scalar_select 0, %s14, %s12
  $region1: #{_forward_impl.1} parent=0
    #allocation2 [shape = 'u8[4096]{0}', space=vmem, size = 0x1000, scoped, tag = 'output window, operand 0, single buffered']
    #allocation3 [shape = 's32[1]{0}', space=sflag, size = 0x4, scoped, tag = 'scoped memory for _forward_impl.1']
    #allocation4 [shape = 'u8[4096]{0}', space=vmem, size = 0x1000, scoped, tag = 'output window, operand 1, single buffered']
    #allocation5 [shape = 's32[1]{0}', space=sflag, size = 0x4, scoped, tag = 'scoped memory for _forward_impl.1']
    %16 = vsyncpa [#allocation3], 0
    %17 = vsyncpa [#allocation5], 0
    // Predicated region
    $region2: #{_forward_impl.1} parent=1 // pred_check
      _
    $region3: #{_forward_impl.1} parent=1 // pred_check_branch
      %19 = sbr.rel (0) target = $region5
    $region4: #{_forward_impl.1} parent=1 // pred_region
      _
    $region5: #{_forward_impl.1} parent=1 // pred_fallthru
      _
    // Predicated region
    $region6: #{_forward_impl.1} parent=1 // pred_check
      _
    $region7: #{_forward_impl.1} parent=1 // pred_check_branch
      %21 = sbr.rel (0) target = $region9
    $region8: #{_forward_impl.1} parent=1 // pred_region
      _
    $region9: #{_forward_impl.1} parent=1 // pred_fallthru
      _
    // Predicated region
    $region10: #{_forward_impl.1} parent=1 // pred_check
      _
    $region11: #{_forward_impl.1} parent=1 // pred_check_branch
      %23 = sbr.rel (0) target = $region13
    $region12: #{_forward_impl.1} parent=1 // pred_region
      _
    $region13: #{_forward_impl.1} parent=1 // pred_fallthru
      _
    // Predicated region
    $region14: #{_forward_impl.1} parent=1 // pred_check
      _
    $region15: #{_forward_impl.1} parent=1 // pred_check_branch
      %25 = sbr.rel (0) target = $region17
    $region16: #{_forward_impl.1} parent=1 // pred_region
      _
    $region17: #{_forward_impl.1} parent=1 // pred_fallthru
      _
    // Predicated region
    $region18: #{_forward_impl.1} parent=1 // pred_check
      _
    $region19: #{_forward_impl.1} parent=1 // pred_check_branch
      %27 = sbr.rel (0) target = $region21
    $region20: #{_forward_impl.1} parent=1 // pred_region
      _
    $region21: #{_forward_impl.1} parent=1 // pred_fallthru
      _
    // Predicated region
    $region22: #{_forward_impl.1} parent=1 // pred_check
      _
    $region23: #{_forward_impl.1} parent=1 // pred_check_branch
      %29 = sbr.rel (0) target = $region25
    $region24: #{_forward_impl.1} parent=1 // pred_region
      _
    $region25: #{_forward_impl.1} parent=1 // pred_fallthru
      _
    // Predicated region
    $region26: #{_forward_impl.1} parent=1 // pred_check
      _
    $region27: #{_forward_impl.1} parent=1 // pred_check_branch
      %31 = sbr.rel (0) target = $region29
    $region28: #{_forward_impl.1} parent=1 // pred_region
      _
    $region29: #{_forward_impl.1} parent=1 // pred_fallthru
      _
    // Predicated region
    $region30: #{_forward_impl.1} parent=1 // pred_check
      _
    $region31: #{_forward_impl.1} parent=1 // pred_check_branch
      %33 = sbr.rel (0) target = $region33
    $region32: #{_forward_impl.1} parent=1 // pred_region
      _
    $region33: #{_forward_impl.1} parent=1 // pred_fallthru
      _
    // Predicated region
    $region34: #{_forward_impl.1} parent=1 // pred_check
      _
    $region35: #{_forward_impl.1} parent=1 // pred_check_branch
      %35 = sbr.rel (0) target = $region37
    $region36: #{_forward_impl.1} parent=1 // pred_region
      _
    $region37: #{_forward_impl.1} parent=1 // pred_fallthru
      _
    %v36 = vld [vmem:[%s0] sm:$0xff]
    %v37 = vld [vmem:[%s1] sm:$0xff]
    %v38 = vld [vmem:[%s1 + $0x8] sm:$0xff]
    %v39 = vld [vmem:[%s1 + $0x10] sm:$0xff]
    %v40 = vld [vmem:[%s1 + $0x18] sm:$0xff]
    %v41 = vld [vmem:[%s2] sm:$0x1]
    %v43 = vlaneseq
    %v44 = vshrl.u32 %v43, 7
    %v45 = vsub.s32 0, %v44
    %v46 = vrot.slane %v41, %v45
    %vm48 = vcmask 261120
    %v50 = vsel %vm48, %v36, 0
    %52 = vmatprep.subr.mxu0 0.0
    %53 = vmatpush1.msra.mxu0 %v37
    %54 = vmatprep.subr.mxu0 0.0
    %55 = vmatpush1.msra.mxu0 %v38
    %56 = vmatprep.subr.mxu0 0.0
    %57 = vmatpush1.msra.mxu0 %v39
    %58 = vmatprep.subr.mxu0 0.0
    %59 = vmatpush1.msra.mxu0 %v40
    %60 = vmatprep.subr.mxu0 0.0
    %61 = vmatpush1.msra.mxu0 0.0
    %62 = vmatprep.subr.mxu0 0.0
    %63 = vmatpush1.msra.mxu0 0.0
    %64 = vmatprep.subr.mxu0 0.0
    %65 = vmatpush1.msra.mxu0 0.0
    %66 = vmatprep.subr.mxu0 0.0
    %67 = vmatpush1.msra.mxu0 0.0
    %68 = vmatprep.subr.mxu0 0.0
    %69 = vmatpush1.msra.mxu0 0.0
    %70 = vmatprep.subr.mxu0 0.0
    %71 = vmatpush1.msra.mxu0 0.0
    %72 = vmatprep.subr.mxu0 0.0
    %73 = vmatpush1.msra.mxu0 0.0
    %74 = vmatprep.subr.mxu0 0.0
    %75 = vmatpush1.msra.mxu0 0.0
    %76 = vmatprep.subr.mxu0 0.0
    %77 = vmatpush1.msra.mxu0 0.0
    %78 = vmatprep.subr.mxu0 0.0
    %79 = vmatpush1.msra.mxu0 0.0
    %80 = vmatprep.subr.mxu0 0.0
    %81 = vmatpush1.msra.mxu0 0.0
    %82 = vmatprep.subr.mxu0 0.0
    %83 = vmatpush1.msra.mxu0 0.0
    %84 = vmatprep.subr.mxu0 0.0
    %85 = vmatpush1.msra.mxu0 0.0
    %86 = vmatprep.subr.mxu0 0.0
    %87 = vmatpush1.msra.mxu0 0.0
    %88 = vmatprep.subr.mxu0 0.0
    %89 = vmatpush1.msra.mxu0 0.0
    %90 = vmatprep.subr.mxu0 0.0
    %91 = vmatpush1.msra.mxu0 0.0
    %92 = vmatprep.subr.mxu0 0.0
    %93 = vmatpush1.msra.mxu0 0.0
    %94 = vmatprep.subr.mxu0 0.0
    %95 = vmatpush1.msra.mxu0 0.0
    %96 = vmatprep.subr.mxu0 0.0
    %97 = vmatpush1.msra.mxu0 0.0
    %98 = vmatprep.subr.mxu0 0.0
    %99 = vmatpush1.msra.mxu0 0.0
    %100 = vmatprep.subr.mxu0 0.0
    %101 = vmatpush1.msra.mxu0 0.0
    %102 = vmatprep.subr.mxu0 0.0
    %103 = vmatpush1.msra.mxu0 0.0
    %104 = vmatprep.subr.mxu0 0.0
    %105 = vmatpush1.msra.mxu0 0.0
    %106 = vmatprep.subr.mxu0 0.0
    %107 = vmatpush1.msra.mxu0 0.0
    %108 = vmatprep.subr.mxu0 0.0
    %109 = vmatpush1.msra.mxu0 0.0
    %110 = vmatprep.subr.mxu0 0.0
    %111 = vmatpush1.msra.mxu0 0.0
    %112 = vmatprep.subr.mxu0 0.0
    %113 = vmatpush1.msra.mxu0 0.0
    %114 = vmatprep.subr.mxu0 0.0
    %115 = vmatpush1.msra.mxu0 0.0
    %116 = vmatprep.mubr.f32.mxu0 0.0
    %117 = vmatmul.mubr.f32.gmra.mrb[0].mxu0 %v50
    %v118 = vpop.f32.mrb[0].mxu0
    %v119 = vadd.f32 %v46, %v118
    %v120 = vpop.f32.mrb[0].mxu0
    %121 = vdwg.mxu0
    %v122 = vmax.f32 %v119, 0.0
    %v123 = vld [vmem:[%s3] sm:$0xff]
    %v124 = vld [vmem:[%s3 + $0x8] sm:$0xff]
    %v125 = vld [vmem:[%s3 + $0x10] sm:$0xff]
    %v126 = vld [vmem:[%s3 + $0x18] sm:$0xff]
    %v127 = vld [vmem:[%s3 + $0x20] sm:$0xff]
    %v128 = vld [vmem:[%s3 + $0x28] sm:$0xff]
    %v129 = vld [vmem:[%s3 + $0x30] sm:$0xff]
    %v130 = vld [vmem:[%s3 + $0x38] sm:$0xff]
    %v131 = vld [vmem:[%s4] sm:$0x1]
    %v133 = vlaneseq
    %v134 = vshrl.u32 %v133, 7
    %v135 = vsub.s32 0, %v134
    %v136 = vrot.slane %v131, %v135
    %vm138 = vcmask 523264
    %v140 = vsel %vm138, %v122, 0
    %142 = vmatprep.subr.mxu0 0.0
    %143 = vmatpush1.msra.mxu0 %v123
    %144 = vmatprep.subr.mxu0 0.0
    %145 = vmatpush1.msra.mxu0 %v124
    %146 = vmatprep.subr.mxu0 0.0
    %147 = vmatpush1.msra.mxu0 %v125
    %148 = vmatprep.subr.mxu0 0.0
    %149 = vmatpush1.msra.mxu0 %v126
    %150 = vmatprep.subr.mxu0 0.0
    %151 = vmatpush1.msra.mxu0 %v127
    %152 = vmatprep.subr.mxu0 0.0
    %153 = vmatpush1.msra.mxu0 %v128
    %154 = vmatprep.subr.mxu0 0.0
    %155 = vmatpush1.msra.mxu0 %v129
    %156 = vmatprep.subr.mxu0 0.0
    %157 = vmatpush1.msra.mxu0 %v130
    %158 = vmatprep.subr.mxu0 0.0
    %159 = vmatpush1.msra.mxu0 0.0
    %160 = vmatprep.subr.mxu0 0.0
    %161 = vmatpush1.msra.mxu0 0.0
    %162 = vmatprep.subr.mxu0 0.0
    %163 = vmatpush1.msra.mxu0 0.0
    %164 = vmatprep.subr.mxu0 0.0
    %165 = vmatpush1.msra.mxu0 0.0
    %166 = vmatprep.subr.mxu0 0.0
    %167 = vmatpush1.msra.mxu0 0.0
    %168 = vmatprep.subr.mxu0 0.0
    %169 = vmatpush1.msra.mxu0 0.0
    %170 = vmatprep.subr.mxu0 0.0
    %171 = vmatpush1.msra.mxu0 0.0
    %172 = vmatprep.subr.mxu0 0.0
    %173 = vmatpush1.msra.mxu0 0.0
    %174 = vmatprep.subr.mxu0 0.0
    %175 = vmatpush1.msra.mxu0 0.0
    %176 = vmatprep.subr.mxu0 0.0
    %177 = vmatpush1.msra.mxu0 0.0
    %178 = vmatprep.subr.mxu0 0.0
    %179 = vmatpush1.msra.mxu0 0.0
    %180 = vmatprep.subr.mxu0 0.0
    %181 = vmatpush1.msra.mxu0 0.0
    %182 = vmatprep.subr.mxu0 0.0
    %183 = vmatpush1.msra.mxu0 0.0
    %184 = vmatprep.subr.mxu0 0.0
    %185 = vmatpush1.msra.mxu0 0.0
    %186 = vmatprep.subr.mxu0 0.0
    %187 = vmatpush1.msra.mxu0 0.0
    %188 = vmatprep.subr.mxu0 0.0
    %189 = vmatpush1.msra.mxu0 0.0
    %190 = vmatprep.subr.mxu0 0.0
    %191 = vmatpush1.msra.mxu0 0.0
    %192 = vmatprep.subr.mxu0 0.0
    %193 = vmatpush1.msra.mxu0 0.0
    %194 = vmatprep.subr.mxu0 0.0
    %195 = vmatpush1.msra.mxu0 0.0
    %196 = vmatprep.subr.mxu0 0.0
    %197 = vmatpush1.msra.mxu0 0.0
    %198 = vmatprep.subr.mxu0 0.0
    %199 = vmatpush1.msra.mxu0 0.0
    %200 = vmatprep.subr.mxu0 0.0
    %201 = vmatpush1.msra.mxu0 0.0
    %202 = vmatprep.subr.mxu0 0.0
    %203 = vmatpush1.msra.mxu0 0.0
    %204 = vmatprep.subr.mxu0 0.0
    %205 = vmatpush1.msra.mxu0 0.0
    %206 = vmatprep.mubr.f32.mxu0 0.0
    %207 = vmatmul.mubr.f32.gmra.mrb[0].mxu0 %v140
    %v208 = vpop.f32.mrb[0].mxu0
    %v209 = vadd.f32 %v136, %v208
    %v210 = vpop.f32.mrb[0].mxu0
    %211 = vdwg.mxu0
    %v212 = vld [vmem:[%s5] sm:$0xff]
    %v213 = vld [vmem:[%s5 + $0x8] sm:$0xff]
    %v214 = vld [vmem:[%s6] sm:$0x1]
    %v216 = vlaneseq
    %v217 = vshrl.u32 %v216, 7
    %v218 = vsub.s32 0, %v217
    %v219 = vrot.slane %v214, %v218
    %vm221 = vcmask 130048
    %v223 = vsel %vm221, %v209, 0
    %225 = vmatprep.subr.mxu0 0.0
    %226 = vmatpush1.msra.mxu0 %v212
    %227 = vmatprep.subr.mxu0 0.0
    %228 = vmatpush1.msra.mxu0 %v213
    %229 = vmatprep.subr.mxu0 0.0
    %230 = vmatpush1.msra.mxu0 0.0
    %231 = vmatprep.subr.mxu0 0.0
    %232 = vmatpush1.msra.mxu0 0.0
    %233 = vmatprep.subr.mxu0 0.0
    %234 = vmatpush1.msra.mxu0 0.0
    %235 = vmatprep.subr.mxu0 0.0
    %236 = vmatpush1.msra.mxu0 0.0
    %237 = vmatprep.subr.mxu0 0.0
    %238 = vmatpush1.msra.mxu0 0.0
    %239 = vmatprep.subr.mxu0 0.0
    %240 = vmatpush1.msra.mxu0 0.0
    %241 = vmatprep.subr.mxu0 0.0
    %242 = vmatpush1.msra.mxu0 0.0
    %243 = vmatprep.subr.mxu0 0.0
    %244 = vmatpush1.msra.mxu0 0.0
    %245 = vmatprep.subr.mxu0 0.0
    %246 = vmatpush1.msra.mxu0 0.0
    %247 = vmatprep.subr.mxu0 0.0
    %248 = vmatpush1.msra.mxu0 0.0
    %249 = vmatprep.subr.mxu0 0.0
    %250 = vmatpush1.msra.mxu0 0.0
    %251 = vmatprep.subr.mxu0 0.0
    %252 = vmatpush1.msra.mxu0 0.0
    %253 = vmatprep.subr.mxu0 0.0
    %254 = vmatpush1.msra.mxu0 0.0
    %255 = vmatprep.subr.mxu0 0.0
    %256 = vmatpush1.msra.mxu0 0.0
    %257 = vmatprep.subr.mxu0 0.0
    %258 = vmatpush1.msra.mxu0 0.0
    %259 = vmatprep.subr.mxu0 0.0
    %260 = vmatpush1.msra.mxu0 0.0
    %261 = vmatprep.subr.mxu0 0.0
    %262 = vmatpush1.msra.mxu0 0.0
    %263 = vmatprep.subr.mxu0 0.0
    %264 = vmatpush1.msra.mxu0 0.0
    %265 = vmatprep.subr.mxu0 0.0
    %266 = vmatpush1.msra.mxu0 0.0
    %267 = vmatprep.subr.mxu0 0.0
    %268 = vmatpush1.msra.mxu0 0.0
    %269 = vmatprep.subr.mxu0 0.0
    %270 = vmatpush1.msra.mxu0 0.0
    %271 = vmatprep.subr.mxu0 0.0
    %272 = vmatpush1.msra.mxu0 0.0
    %273 = vmatprep.subr.mxu0 0.0
    %274 = vmatpush1.msra.mxu0 0.0
    %275 = vmatprep.subr.mxu0 0.0
    %276 = vmatpush1.msra.mxu0 0.0
    %277 = vmatprep.subr.mxu0 0.0
    %278 = vmatpush1.msra.mxu0 0.0
    %279 = vmatprep.subr.mxu0 0.0
    %280 = vmatpush1.msra.mxu0 0.0
    %281 = vmatprep.subr.mxu0 0.0
    %282 = vmatpush1.msra.mxu0 0.0
    %283 = vmatprep.subr.mxu0 0.0
    %284 = vmatpush1.msra.mxu0 0.0
    %285 = vmatprep.subr.mxu0 0.0
    %286 = vmatpush1.msra.mxu0 0.0
    %287 = vmatprep.subr.mxu0 0.0
    %288 = vmatpush1.msra.mxu0 0.0
    %289 = vmatprep.mubr.f32.mxu0 0.0
    %290 = vmatmul.mubr.f32.gmra.mrb[0].mxu0 %v223
    %v291 = vpop.f32.mrb[0].mxu0
    %v292 = vadd.f32 %v219, %v291
    %v293 = vpop.f32.mrb[0].mxu0
    %294 = vdwg.mxu0
    %v295 = vmax.f32 %v292, 0.0
    %v296 = vld [vmem:[%s7] sm:$0xff]
    %v297 = vld [vmem:[%s7 + $0x8] sm:$0xff]
    %v298 = vld [vmem:[%s7 + $0x10] sm:$0xff]
    %v299 = vld [vmem:[%s7 + $0x18] sm:$0xff]
    %v300 = vld [vmem:[%s7 + $0x20] sm:$0xff]
    %v301 = vld [vmem:[%s7 + $0x28] sm:$0xff]
    %v302 = vld [vmem:[%s7 + $0x30] sm:$0xff]
    %v303 = vld [vmem:[%s7 + $0x38] sm:$0xff]
    %v304 = vld [vmem:[%s8] sm:$0x1]
    %v306 = vlaneseq
    %v307 = vshrl.u32 %v306, 7
    %v308 = vsub.s32 0, %v307
    %v309 = vrot.slane %v304, %v308
    %v312 = vsel %vm138, %v295, 0
    %314 = vmatprep.subr.mxu0 0.0
    %315 = vmatpush1.msra.mxu0 %v296
    %316 = vmatprep.subr.mxu0 0.0
    %317 = vmatpush1.msra.mxu0 %v297
    %318 = vmatprep.subr.mxu0 0.0
    %319 = vmatpush1.msra.mxu0 %v298
    %320 = vmatprep.subr.mxu0 0.0
    %321 = vmatpush1.msra.mxu0 %v299
    %322 = vmatprep.subr.mxu0 0.0
    %323 = vmatpush1.msra.mxu0 %v300
    %324 = vmatprep.subr.mxu0 0.0
    %325 = vmatpush1.msra.mxu0 %v301
    %326 = vmatprep.subr.mxu0 0.0
    %327 = vmatpush1.msra.mxu0 %v302
    %328 = vmatprep.subr.mxu0 0.0
    %329 = vmatpush1.msra.mxu0 %v303
    %330 = vmatprep.subr.mxu0 0.0
    %331 = vmatpush1.msra.mxu0 0.0
    %332 = vmatprep.subr.mxu0 0.0
    %333 = vmatpush1.msra.mxu0 0.0
    %334 = vmatprep.subr.mxu0 0.0
    %335 = vmatpush1.msra.mxu0 0.0
    %336 = vmatprep.subr.mxu0 0.0
    %337 = vmatpush1.msra.mxu0 0.0
    %338 = vmatprep.subr.mxu0 0.0
    %339 = vmatpush1.msra.mxu0 0.0
    %340 = vmatprep.subr.mxu0 0.0
    %341 = vmatpush1.msra.mxu0 0.0
    %342 = vmatprep.subr.mxu0 0.0
    %343 = vmatpush1.msra.mxu0 0.0
    %344 = vmatprep.subr.mxu0 0.0
    %345 = vmatpush1.msra.mxu0 0.0
    %346 = vmatprep.subr.mxu0 0.0
    %347 = vmatpush1.msra.mxu0 0.0
    %348 = vmatprep.subr.mxu0 0.0
    %349 = vmatpush1.msra.mxu0 0.0
    %350 = vmatprep.subr.mxu0 0.0
    %351 = vmatpush1.msra.mxu0 0.0
    %352 = vmatprep.subr.mxu0 0.0
    %353 = vmatpush1.msra.mxu0 0.0
    %354 = vmatprep.subr.mxu0 0.0
    %355 = vmatpush1.msra.mxu0 0.0
    %356 = vmatprep.subr.mxu0 0.0
    %357 = vmatpush1.msra.mxu0 0.0
    %358 = vmatprep.subr.mxu0 0.0
    %359 = vmatpush1.msra.mxu0 0.0
    %360 = vmatprep.subr.mxu0 0.0
    %361 = vmatpush1.msra.mxu0 0.0
    %362 = vmatprep.subr.mxu0 0.0
    %363 = vmatpush1.msra.mxu0 0.0
    %364 = vmatprep.subr.mxu0 0.0
    %365 = vmatpush1.msra.mxu0 0.0
    %366 = vmatprep.subr.mxu0 0.0
    %367 = vmatpush1.msra.mxu0 0.0
    %368 = vmatprep.subr.mxu0 0.0
    %369 = vmatpush1.msra.mxu0 0.0
    %370 = vmatprep.subr.mxu0 0.0
    %371 = vmatpush1.msra.mxu0 0.0
    %372 = vmatprep.subr.mxu0 0.0
    %373 = vmatpush1.msra.mxu0 0.0
    %374 = vmatprep.subr.mxu0 0.0
    %375 = vmatpush1.msra.mxu0 0.0
    %376 = vmatprep.subr.mxu0 0.0
    %377 = vmatpush1.msra.mxu0 0.0
    %378 = vmatprep.mubr.f32.mxu0 0.0
    %379 = vmatmul.mubr.f32.gmra.mrb[0].mxu0 %v312
    %v380 = vpop.f32.mrb[0].mxu0
    %v381 = vadd.f32 %v309, %v380
    %v382 = vpop.f32.mrb[0].mxu0
    %383 = vdwg.mxu0
    %384 = vst.msk [vmem:[#allocation4] sm:$0xff] %vm221, %v209
    %385 = vst.msk [vmem:[#allocation2] sm:$0xff] %vm48, %v381
    // Predicated region
    $region38: #{_forward_impl.1} parent=1 // pred_check
      _
    $region39: #{_forward_impl.1} parent=1 // pred_check_branch
      %387 = sbr.rel (0) target = $region41
    $region40: #{_forward_impl.1} parent=1 // pred_region
      %s389 = ssub.s32 128, 128
      %390 = vsyncadd [#allocation3], %s389
      %s392 = sshll.u32 [#allocation2], 4
      %s393 = int_to_ptr.vmem [resolvable:$true] %s392
      %395 = dma.vmem_to_hbm [thread:$0]  %s393, 128, %s9, [#allocation3]
    $region41: #{_forward_impl.1} parent=1 // pred_fallthru
      _
    // Predicated region
    $region42: #{_forward_impl.1} parent=1 // pred_check
      _
    $region43: #{_forward_impl.1} parent=1 // pred_check_branch
      %397 = sbr.rel (0) target = $region45
    $region44: #{_forward_impl.1} parent=1 // pred_region
      %s399 = ssub.s32 128, 128
      %400 = vsyncadd [#allocation5], %s399
      %s402 = sshll.u32 [#allocation4], 4
      %s403 = int_to_ptr.vmem [resolvable:$true] %s402
      %405 = dma.vmem_to_hbm [thread:$0]  %s403, 128, %s10, [#allocation5]
    $region45: #{_forward_impl.1} parent=1 // pred_fallthru
      _
    // Predicated region
    $region46: #{_forward_impl.1} parent=1 // pred_check
      _
    $region47: #{_forward_impl.1} parent=1 // pred_check_branch
      %407 = sbr.rel (0) target = $region49
    $region48: #{_forward_impl.1} parent=1 // pred_region
      %408 = dma.done [#allocation3], 128
    $region49: #{_forward_impl.1} parent=1 // pred_fallthru
      _
    // Predicated region
    $region50: #{_forward_impl.1} parent=1 // pred_check
      _
    $region51: #{_forward_impl.1} parent=1 // pred_check_branch
      %410 = sbr.rel (0) target = $region53
    $region52: #{_forward_impl.1} parent=1 // pred_region
      %411 = dma.done [#allocation5], 128
    $region53: #{_forward_impl.1} parent=1 // pred_fallthru
      _
    %412 = vsyncpa [#allocation3], 1
    %413 = vsyncpa [#allocation5], 1

// kernel: _forward_impl.1
$region0: #{_forward_impl.1}
  #allocation0 [shape = 'u32[]', space=smem, size = 0x4, offset = 0x4, fixed_abs, tag = 'smem constant byte address 0x4 - core index']
  #allocation1 [shape = 'u32[144,128]{1,0:T(1,128)}', space=vmem, size = 0x12000, scoped, tag = 'internal scratch']
  %s0 = inlined_call_operand.vmem [shape: f32[8,32], index: 0, kind: input, shape index: {}]
  %s1 = inlined_call_operand.vmem [shape: f32[32,64], index: 1, kind: input, shape index: {}]
  %s2 = inlined_call_operand.vmem [shape: f32[1,64], index: 2, kind: input, shape index: {}]
  %s3 = inlined_call_operand.vmem [shape: f32[64,16], index: 3, kind: input, shape index: {}]
  %s4 = inlined_call_operand.vmem [shape: f32[1,16], index: 4, kind: input, shape index: {}]
  %s5 = inlined_call_operand.vmem [shape: f32[16,64], index: 5, kind: input, shape index: {}]
  %s6 = inlined_call_operand.vmem [shape: f32[1,64], index: 6, kind: input, shape index: {}]
  %s7 = inlined_call_operand.vmem [shape: f32[64,32], index: 7, kind: input, shape index: {}]
  %s8 = inlined_call_operand.vmem [shape: f32[1,32], index: 8, kind: input, shape index: {}]
  %s9 = inlined_call_operand.hbm [shape: f32[8,32], index: 9, kind: output, shape index: {0}]
  %s10 = inlined_call_operand.hbm [shape: f32[8,16], index: 10, kind: output, shape index: {1}]
  %11 = xla_tuple %s9, %s10
  %s12 = sld [smem:[#allocation0]]
  $region54: #{_forward_impl.1} parent=0
    _
  %s14 = ssub.s32 1, %s12
  %s15 = scalar_select 0, %s14, %s12
  $region1: #{_forward_impl.1} parent=0
    #allocation2 [shape = 'u8[4096]{0}', space=vmem, size = 0x1000, scoped, tag = 'output window, operand 0, single buffered']
    #allocation3 [shape = 's32[1]{0}', space=sflag, size = 0x4, scoped, tag = 'scoped memory for _forward_impl.1']
    #allocation4 [shape = 'u8[4096]{0}', space=vmem, size = 0x1000, scoped, tag = 'output window, operand 1, single buffered']
    #allocation5 [shape = 's32[1]{0}', space=sflag, size = 0x4, scoped, tag = 'scoped memory for _forward_impl.1']
    %16 = vsyncpa [#allocation3], 0
    %17 = vsyncpa [#allocation5], 0
    // Predicated region
    $region2: #{_forward_impl.1} parent=1 // pred_check
      _
    $region3: #{_forward_impl.1} parent=1 // pred_check_branch
      %19 = sbr.rel (0) target = $region5
    $region4: #{_forward_impl.1} parent=1 // pred_region
      _
    $region5: #{_forward_impl.1} parent=1 // pred_fallthru
      _
    // Predicated region
    $region6: #{_forward_impl.1} parent=1 // pred_check
      _
    $region7: #{_forward_impl.1} parent=1 // pred_check_branch
      %21 = sbr.rel (0) target = $region9
    $region8: #{_forward_impl.1} parent=1 // pred_region
      _
    $region9: #{_forward_impl.1} parent=1 // pred_fallthru
      _
    // Predicated region
    $region10: #{_forward_impl.1} parent=1 // pred_check
      _
    $region11: #{_forward_impl.1} parent=1 // pred_check_branch
      %23 = sbr.rel (0) target = $region13
    $region12: #{_forward_impl.1} parent=1 // pred_region
      _
    $region13: #{_forward_impl.1} parent=1 // pred_fallthru
      _
    // Predicated region
    $region14: #{_forward_impl.1} parent=1 // pred_check
      _
    $region15: #{_forward_impl.1} parent=1 // pred_check_branch
      %25 = sbr.rel (0) target = $region17
    $region16: #{_forward_impl.1} parent=1 // pred_region
      _
    $region17: #{_forward_impl.1} parent=1 // pred_fallthru
      _
    // Predicated region
    $region18: #{_forward_impl.1} parent=1 // pred_check
      _
    $region19: #{_forward_impl.1} parent=1 // pred_check_branch
      %27 = sbr.rel (0) target = $region21
    $region20: #{_forward_impl.1} parent=1 // pred_region
      _
    $region21: #{_forward_impl.1} parent=1 // pred_fallthru
      _
    // Predicated region
    $region22: #{_forward_impl.1} parent=1 // pred_check
      _
    $region23: #{_forward_impl.1} parent=1 // pred_check_branch
      %29 = sbr.rel (0) target = $region25
    $region24: #{_forward_impl.1} parent=1 // pred_region
      _
    $region25: #{_forward_impl.1} parent=1 // pred_fallthru
      _
    // Predicated region
    $region26: #{_forward_impl.1} parent=1 // pred_check
      _
    $region27: #{_forward_impl.1} parent=1 // pred_check_branch
      %31 = sbr.rel (0) target = $region29
    $region28: #{_forward_impl.1} parent=1 // pred_region
      _
    $region29: #{_forward_impl.1} parent=1 // pred_fallthru
      _
    // Predicated region
    $region30: #{_forward_impl.1} parent=1 // pred_check
      _
    $region31: #{_forward_impl.1} parent=1 // pred_check_branch
      %33 = sbr.rel (0) target = $region33
    $region32: #{_forward_impl.1} parent=1 // pred_region
      _
    $region33: #{_forward_impl.1} parent=1 // pred_fallthru
      _
    // Predicated region
    $region34: #{_forward_impl.1} parent=1 // pred_check
      _
    $region35: #{_forward_impl.1} parent=1 // pred_check_branch
      %35 = sbr.rel (0) target = $region37
    $region36: #{_forward_impl.1} parent=1 // pred_region
      _
    $region37: #{_forward_impl.1} parent=1 // pred_fallthru
      _
    %v36 = vld [vmem:[%s0] sm:$0xff]
    %v37 = vld [vmem:[%s1] sm:$0xff]
    %v38 = vld [vmem:[%s1 + $0x8] sm:$0xff]
    %v39 = vld [vmem:[%s1 + $0x10] sm:$0xff]
    %v40 = vld [vmem:[%s1 + $0x18] sm:$0xff]
    %v41 = vld [vmem:[%s2] sm:$0x1]
    %v43 = vlaneseq
    %v44 = vshrl.u32 %v43, 7
    %v45 = vsub.s32 0, %v44
    %v46 = vrot.slane %v41, %v45
    %vm48 = vcmask 261120
    %v50 = vsel %vm48, %v36, 0
    %52 = vmatprep.subr.mxu0 0.0
    %53 = vmatpush1.msra.mxu0 %v37
    %54 = vmatprep.subr.mxu0 0.0
    %55 = vmatpush1.msra.mxu0 %v38
    %56 = vmatprep.subr.mxu0 0.0
    %57 = vmatpush1.msra.mxu0 %v39
    %58 = vmatprep.subr.mxu0 0.0
    %59 = vmatpush1.msra.mxu0 %v40
    %60 = vmatprep.subr.mxu0 0.0
    %61 = vmatpush1.msra.mxu0 0.0
    %62 = vmatprep.subr.mxu0 0.0
    %63 = vmatpush1.msra.mxu0 0.0
    %64 = vmatprep.subr.mxu0 0.0
    %65 = vmatpush1.msra.mxu0 0.0
    %66 = vmatprep.subr.mxu0 0.0
    %67 = vmatpush1.msra.mxu0 0.0
    %68 = vmatprep.subr.mxu0 0.0
    %69 = vmatpush1.msra.mxu0 0.0
    %70 = vmatprep.subr.mxu0 0.0
    %71 = vmatpush1.msra.mxu0 0.0
    %72 = vmatprep.subr.mxu0 0.0
    %73 = vmatpush1.msra.mxu0 0.0
    %74 = vmatprep.subr.mxu0 0.0
    %75 = vmatpush1.msra.mxu0 0.0
    %76 = vmatprep.subr.mxu0 0.0
    %77 = vmatpush1.msra.mxu0 0.0
    %78 = vmatprep.subr.mxu0 0.0
    %79 = vmatpush1.msra.mxu0 0.0
    %80 = vmatprep.subr.mxu0 0.0
    %81 = vmatpush1.msra.mxu0 0.0
    %82 = vmatprep.subr.mxu0 0.0
    %83 = vmatpush1.msra.mxu0 0.0
    %84 = vmatprep.subr.mxu0 0.0
    %85 = vmatpush1.msra.mxu0 0.0
    %86 = vmatprep.subr.mxu0 0.0
    %87 = vmatpush1.msra.mxu0 0.0
    %88 = vmatprep.subr.mxu0 0.0
    %89 = vmatpush1.msra.mxu0 0.0
    %90 = vmatprep.subr.mxu0 0.0
    %91 = vmatpush1.msra.mxu0 0.0
    %92 = vmatprep.subr.mxu0 0.0
    %93 = vmatpush1.msra.mxu0 0.0
    %94 = vmatprep.subr.mxu0 0.0
    %95 = vmatpush1.msra.mxu0 0.0
    %96 = vmatprep.subr.mxu0 0.0
    %97 = vmatpush1.msra.mxu0 0.0
    %98 = vmatprep.subr.mxu0 0.0
    %99 = vmatpush1.msra.mxu0 0.0
    %100 = vmatprep.subr.mxu0 0.0
    %101 = vmatpush1.msra.mxu0 0.0
    %102 = vmatprep.subr.mxu0 0.0
    %103 = vmatpush1.msra.mxu0 0.0
    %104 = vmatprep.subr.mxu0 0.0
    %105 = vmatpush1.msra.mxu0 0.0
    %106 = vmatprep.subr.mxu0 0.0
    %107 = vmatpush1.msra.mxu0 0.0
    %108 = vmatprep.subr.mxu0 0.0
    %109 = vmatpush1.msra.mxu0 0.0
    %110 = vmatprep.subr.mxu0 0.0
    %111 = vmatpush1.msra.mxu0 0.0
    %112 = vmatprep.subr.mxu0 0.0
    %113 = vmatpush1.msra.mxu0 0.0
    %114 = vmatprep.subr.mxu0 0.0
    %115 = vmatpush1.msra.mxu0 0.0
    %116 = vmatprep.mubr.f32.mxu0 0.0
    %117 = vmatmul.mubr.f32.gmra.mrb[0].mxu0 %v50
    %v118 = vpop.f32.mrb[0].mxu0
    %v119 = vadd.f32 %v46, %v118
    %v120 = vpop.f32.mrb[0].mxu0
    %121 = vdwg.mxu0
    %v122 = vmax.f32 %v119, 0.0
    %v123 = vld [vmem:[%s3] sm:$0xff]
    %v124 = vld [vmem:[%s3 + $0x8] sm:$0xff]
    %v125 = vld [vmem:[%s3 + $0x10] sm:$0xff]
    %v126 = vld [vmem:[%s3 + $0x18] sm:$0xff]
    %v127 = vld [vmem:[%s3 + $0x20] sm:$0xff]
    %v128 = vld [vmem:[%s3 + $0x28] sm:$0xff]
    %v129 = vld [vmem:[%s3 + $0x30] sm:$0xff]
    %v130 = vld [vmem:[%s3 + $0x38] sm:$0xff]
    %v131 = vld [vmem:[%s4] sm:$0x1]
    %v133 = vlaneseq
    %v134 = vshrl.u32 %v133, 7
    %v135 = vsub.s32 0, %v134
    %v136 = vrot.slane %v131, %v135
    %vm138 = vcmask 523264
    %v140 = vsel %vm138, %v122, 0
    %142 = vmatprep.subr.mxu0 0.0
    %143 = vmatpush1.msra.mxu0 %v123
    %144 = vmatprep.subr.mxu0 0.0
    %145 = vmatpush1.msra.mxu0 %v124
    %146 = vmatprep.subr.mxu0 0.0
    %147 = vmatpush1.msra.mxu0 %v125
    %148 = vmatprep.subr.mxu0 0.0
    %149 = vmatpush1.msra.mxu0 %v126
    %150 = vmatprep.subr.mxu0 0.0
    %151 = vmatpush1.msra.mxu0 %v127
    %152 = vmatprep.subr.mxu0 0.0
    %153 = vmatpush1.msra.mxu0 %v128
    %154 = vmatprep.subr.mxu0 0.0
    %155 = vmatpush1.msra.mxu0 %v129
    %156 = vmatprep.subr.mxu0 0.0
    %157 = vmatpush1.msra.mxu0 %v130
    %158 = vmatprep.subr.mxu0 0.0
    %159 = vmatpush1.msra.mxu0 0.0
    %160 = vmatprep.subr.mxu0 0.0
    %161 = vmatpush1.msra.mxu0 0.0
    %162 = vmatprep.subr.mxu0 0.0
    %163 = vmatpush1.msra.mxu0 0.0
    %164 = vmatprep.subr.mxu0 0.0
    %165 = vmatpush1.msra.mxu0 0.0
    %166 = vmatprep.subr.mxu0 0.0
    %167 = vmatpush1.msra.mxu0 0.0
    %168 = vmatprep.subr.mxu0 0.0
    %169 = vmatpush1.msra.mxu0 0.0
    %170 = vmatprep.subr.mxu0 0.0
    %171 = vmatpush1.msra.mxu0 0.0
    %172 = vmatprep.subr.mxu0 0.0
    %173 = vmatpush1.msra.mxu0 0.0
    %174 = vmatprep.subr.mxu0 0.0
    %175 = vmatpush1.msra.mxu0 0.0
    %176 = vmatprep.subr.mxu0 0.0
    %177 = vmatpush1.msra.mxu0 0.0
    %178 = vmatprep.subr.mxu0 0.0
    %179 = vmatpush1.msra.mxu0 0.0
    %180 = vmatprep.subr.mxu0 0.0
    %181 = vmatpush1.msra.mxu0 0.0
    %182 = vmatprep.subr.mxu0 0.0
    %183 = vmatpush1.msra.mxu0 0.0
    %184 = vmatprep.subr.mxu0 0.0
    %185 = vmatpush1.msra.mxu0 0.0
    %186 = vmatprep.subr.mxu0 0.0
    %187 = vmatpush1.msra.mxu0 0.0
    %188 = vmatprep.subr.mxu0 0.0
    %189 = vmatpush1.msra.mxu0 0.0
    %190 = vmatprep.subr.mxu0 0.0
    %191 = vmatpush1.msra.mxu0 0.0
    %192 = vmatprep.subr.mxu0 0.0
    %193 = vmatpush1.msra.mxu0 0.0
    %194 = vmatprep.subr.mxu0 0.0
    %195 = vmatpush1.msra.mxu0 0.0
    %196 = vmatprep.subr.mxu0 0.0
    %197 = vmatpush1.msra.mxu0 0.0
    %198 = vmatprep.subr.mxu0 0.0
    %199 = vmatpush1.msra.mxu0 0.0
    %200 = vmatprep.subr.mxu0 0.0
    %201 = vmatpush1.msra.mxu0 0.0
    %202 = vmatprep.subr.mxu0 0.0
    %203 = vmatpush1.msra.mxu0 0.0
    %204 = vmatprep.subr.mxu0 0.0
    %205 = vmatpush1.msra.mxu0 0.0
    %206 = vmatprep.mubr.f32.mxu0 0.0
    %207 = vmatmul.mubr.f32.gmra.mrb[0].mxu0 %v140
    %v208 = vpop.f32.mrb[0].mxu0
    %v209 = vadd.f32 %v136, %v208
    %v210 = vpop.f32.mrb[0].mxu0
    %211 = vdwg.mxu0
    %v212 = vld [vmem:[%s5] sm:$0xff]
    %v213 = vld [vmem:[%s5 + $0x8] sm:$0xff]
    %v214 = vld [vmem:[%s6] sm:$0x1]
    %v216 = vlaneseq
    %v217 = vshrl.u32 %v216, 7
    %v218 = vsub.s32 0, %v217
    %v219 = vrot.slane %v214, %v218
    %vm221 = vcmask 130048
    %v223 = vsel %vm221, %v209, 0
    %225 = vmatprep.subr.mxu0 0.0
    %226 = vmatpush1.msra.mxu0 %v212
    %227 = vmatprep.subr.mxu0 0.0
    %228 = vmatpush1.msra.mxu0 %v213
    %229 = vmatprep.subr.mxu0 0.0
    %230 = vmatpush1.msra.mxu0 0.0
    %231 = vmatprep.subr.mxu0 0.0
    %232 = vmatpush1.msra.mxu0 0.0
    %233 = vmatprep.subr.mxu0 0.0
    %234 = vmatpush1.msra.mxu0 0.0
    %235 = vmatprep.subr.mxu0 0.0
    %236 = vmatpush1.msra.mxu0 0.0
    %237 = vmatprep.subr.mxu0 0.0
    %238 = vmatpush1.msra.mxu0 0.0
    %239 = vmatprep.subr.mxu0 0.0
    %240 = vmatpush1.msra.mxu0 0.0
    %241 = vmatprep.subr.mxu0 0.0
    %242 = vmatpush1.msra.mxu0 0.0
    %243 = vmatprep.subr.mxu0 0.0
    %244 = vmatpush1.msra.mxu0 0.0
    %245 = vmatprep.subr.mxu0 0.0
    %246 = vmatpush1.msra.mxu0 0.0
    %247 = vmatprep.subr.mxu0 0.0
    %248 = vmatpush1.msra.mxu0 0.0
    %249 = vmatprep.subr.mxu0 0.0
    %250 = vmatpush1.msra.mxu0 0.0
    %251 = vmatprep.subr.mxu0 0.0
    %252 = vmatpush1.msra.mxu0 0.0
    %253 = vmatprep.subr.mxu0 0.0
    %254 = vmatpush1.msra.mxu0 0.0
    %255 = vmatprep.subr.mxu0 0.0
    %256 = vmatpush1.msra.mxu0 0.0
    %257 = vmatprep.subr.mxu0 0.0
    %258 = vmatpush1.msra.mxu0 0.0
    %259 = vmatprep.subr.mxu0 0.0
    %260 = vmatpush1.msra.mxu0 0.0
    %261 = vmatprep.subr.mxu0 0.0
    %262 = vmatpush1.msra.mxu0 0.0
    %263 = vmatprep.subr.mxu0 0.0
    %264 = vmatpush1.msra.mxu0 0.0
    %265 = vmatprep.subr.mxu0 0.0
    %266 = vmatpush1.msra.mxu0 0.0
    %267 = vmatprep.subr.mxu0 0.0
    %268 = vmatpush1.msra.mxu0 0.0
    %269 = vmatprep.subr.mxu0 0.0
    %270 = vmatpush1.msra.mxu0 0.0
    %271 = vmatprep.subr.mxu0 0.0
    %272 = vmatpush1.msra.mxu0 0.0
    %273 = vmatprep.subr.mxu0 0.0
    %274 = vmatpush1.msra.mxu0 0.0
    %275 = vmatprep.subr.mxu0 0.0
    %276 = vmatpush1.msra.mxu0 0.0
    %277 = vmatprep.subr.mxu0 0.0
    %278 = vmatpush1.msra.mxu0 0.0
    %279 = vmatprep.subr.mxu0 0.0
    %280 = vmatpush1.msra.mxu0 0.0
    %281 = vmatprep.subr.mxu0 0.0
    %282 = vmatpush1.msra.mxu0 0.0
    %283 = vmatprep.subr.mxu0 0.0
    %284 = vmatpush1.msra.mxu0 0.0
    %285 = vmatprep.subr.mxu0 0.0
    %286 = vmatpush1.msra.mxu0 0.0
    %287 = vmatprep.subr.mxu0 0.0
    %288 = vmatpush1.msra.mxu0 0.0
    %289 = vmatprep.mubr.f32.mxu0 0.0
    %290 = vmatmul.mubr.f32.gmra.mrb[0].mxu0 %v223
    %v291 = vpop.f32.mrb[0].mxu0
    %v292 = vadd.f32 %v219, %v291
    %v293 = vpop.f32.mrb[0].mxu0
    %294 = vdwg.mxu0
    %v295 = vmax.f32 %v292, 0.0
    %v296 = vld [vmem:[%s7] sm:$0xff]
    %v297 = vld [vmem:[%s7 + $0x8] sm:$0xff]
    %v298 = vld [vmem:[%s7 + $0x10] sm:$0xff]
    %v299 = vld [vmem:[%s7 + $0x18] sm:$0xff]
    %v300 = vld [vmem:[%s7 + $0x20] sm:$0xff]
    %v301 = vld [vmem:[%s7 + $0x28] sm:$0xff]
    %v302 = vld [vmem:[%s7 + $0x30] sm:$0xff]
    %v303 = vld [vmem:[%s7 + $0x38] sm:$0xff]
    %v304 = vld [vmem:[%s8] sm:$0x1]
    %v306 = vlaneseq
    %v307 = vshrl.u32 %v306, 7
    %v308 = vsub.s32 0, %v307
    %v309 = vrot.slane %v304, %v308
    %v312 = vsel %vm138, %v295, 0
    %314 = vmatprep.subr.mxu0 0.0
    %315 = vmatpush1.msra.mxu0 %v296
    %316 = vmatprep.subr.mxu0 0.0
    %317 = vmatpush1.msra.mxu0 %v297
    %318 = vmatprep.subr.mxu0 0.0
    %319 = vmatpush1.msra.mxu0 %v298
    %320 = vmatprep.subr.mxu0 0.0
    %321 = vmatpush1.msra.mxu0 %v299
    %322 = vmatprep.subr.mxu0 0.0
    %323 = vmatpush1.msra.mxu0 %v300
    %324 = vmatprep.subr.mxu0 0.0
    %325 = vmatpush1.msra.mxu0 %v301
    %326 = vmatprep.subr.mxu0 0.0
    %327 = vmatpush1.msra.mxu0 %v302
    %328 = vmatprep.subr.mxu0 0.0
    %329 = vmatpush1.msra.mxu0 %v303
    %330 = vmatprep.subr.mxu0 0.0
    %331 = vmatpush1.msra.mxu0 0.0
    %332 = vmatprep.subr.mxu0 0.0
    %333 = vmatpush1.msra.mxu0 0.0
    %334 = vmatprep.subr.mxu0 0.0
    %335 = vmatpush1.msra.mxu0 0.0
    %336 = vmatprep.subr.mxu0 0.0
    %337 = vmatpush1.msra.mxu0 0.0
    %338 = vmatprep.subr.mxu0 0.0
    %339 = vmatpush1.msra.mxu0 0.0
    %340 = vmatprep.subr.mxu0 0.0
    %341 = vmatpush1.msra.mxu0 0.0
    %342 = vmatprep.subr.mxu0 0.0
    %343 = vmatpush1.msra.mxu0 0.0
    %344 = vmatprep.subr.mxu0 0.0
    %345 = vmatpush1.msra.mxu0 0.0
    %346 = vmatprep.subr.mxu0 0.0
    %347 = vmatpush1.msra.mxu0 0.0
    %348 = vmatprep.subr.mxu0 0.0
    %349 = vmatpush1.msra.mxu0 0.0
    %350 = vmatprep.subr.mxu0 0.0
    %351 = vmatpush1.msra.mxu0 0.0
    %352 = vmatprep.subr.mxu0 0.0
    %353 = vmatpush1.msra.mxu0 0.0
    %354 = vmatprep.subr.mxu0 0.0
    %355 = vmatpush1.msra.mxu0 0.0
    %356 = vmatprep.subr.mxu0 0.0
    %357 = vmatpush1.msra.mxu0 0.0
    %358 = vmatprep.subr.mxu0 0.0
    %359 = vmatpush1.msra.mxu0 0.0
    %360 = vmatprep.subr.mxu0 0.0
    %361 = vmatpush1.msra.mxu0 0.0
    %362 = vmatprep.subr.mxu0 0.0
    %363 = vmatpush1.msra.mxu0 0.0
    %364 = vmatprep.subr.mxu0 0.0
    %365 = vmatpush1.msra.mxu0 0.0
    %366 = vmatprep.subr.mxu0 0.0
    %367 = vmatpush1.msra.mxu0 0.0
    %368 = vmatprep.subr.mxu0 0.0
    %369 = vmatpush1.msra.mxu0 0.0
    %370 = vmatprep.subr.mxu0 0.0
    %371 = vmatpush1.msra.mxu0 0.0
    %372 = vmatprep.subr.mxu0 0.0
    %373 = vmatpush1.msra.mxu0 0.0
    %374 = vmatprep.subr.mxu0 0.0
    %375 = vmatpush1.msra.mxu0 0.0
    %376 = vmatprep.subr.mxu0 0.0
    %377 = vmatpush1.msra.mxu0 0.0
    %378 = vmatprep.mubr.f32.mxu0 0.0
    %379 = vmatmul.mubr.f32.gmra.mrb[0].mxu0 %v312
    %v380 = vpop.f32.mrb[0].mxu0
    %v381 = vadd.f32 %v309, %v380
    %v382 = vpop.f32.mrb[0].mxu0
    %383 = vdwg.mxu0
    %384 = vst.msk [vmem:[#allocation4] sm:$0xff] %vm221, %v209
    %385 = vst.msk [vmem:[#allocation2] sm:$0xff] %vm48, %v381
    // Predicated region
    $region38: #{_forward_impl.1} parent=1 // pred_check
      _
    $region39: #{_forward_impl.1} parent=1 // pred_check_branch
      %387 = sbr.rel (0) target = $region41
    $region40: #{_forward_impl.1} parent=1 // pred_region
      %s389 = ssub.s32 128, 128
      %390 = vsyncadd [#allocation3], %s389
      %s392 = sshll.u32 [#allocation2], 4
      %s393 = int_to_ptr.vmem [resolvable:$true] %s392
      %395 = dma.vmem_to_hbm [thread:$0]  %s393, 128, %s9, [#allocation3]
    $region41: #{_forward_impl.1} parent=1 // pred_fallthru
      _
    // Predicated region
    $region42: #{_forward_impl.1} parent=1 // pred_check
      _
    $region43: #{_forward_impl.1} parent=1 // pred_check_branch
      %397 = sbr.rel (0) target = $region45
    $region44: #{_forward_impl.1} parent=1 // pred_region
      %s399 = ssub.s32 128, 128
      %400 = vsyncadd [#allocation5], %s399
      %s402 = sshll.u32 [#allocation4], 4
      %s403 = int_to_ptr.vmem [resolvable:$true] %s402
      %405 = dma.vmem_to_hbm [thread:$0]  %s403, 128, %s10, [#allocation5]
    $region45: #{_forward_impl.1} parent=1 // pred_fallthru
      _
    // Predicated region
    $region46: #{_forward_impl.1} parent=1 // pred_check
      _
    $region47: #{_forward_impl.1} parent=1 // pred_check_branch
      %407 = sbr.rel (0) target = $region49
    $region48: #{_forward_impl.1} parent=1 // pred_region
      %408 = dma.done [#allocation3], 128
    $region49: #{_forward_impl.1} parent=1 // pred_fallthru
      _
    // Predicated region
    $region50: #{_forward_impl.1} parent=1 // pred_check
      _
    $region51: #{_forward_impl.1} parent=1 // pred_check_branch
      %410 = sbr.rel (0) target = $region53
    $region52: #{_forward_impl.1} parent=1 // pred_region
      %411 = dma.done [#allocation5], 128
    $region53: #{_forward_impl.1} parent=1 // pred_fallthru
      _
    %412 = vsyncpa [#allocation3], 1
    %413 = vsyncpa [#allocation5], 1

</llo_original>
